<compile_context>
chip_gen: v7x
topology: tpu7x:2x2x1
jax: 0.10.0
libtpu: 0.0.40
codegen_flags: <defaults>
</compile_context>

<pallas_src>
import functools

import jax
import jax.numpy as jnp
from jax import lax
from jax.experimental import pallas as pl
from jax.experimental.pallas import tpu as pltpu


def _round_up(x, m):
    return ((x + m - 1) // m) * m


def _vmem_capacity_bytes():
    try:
        return int(pltpu.get_tpu_info().vmem_capacity_bytes)
    except Exception:
        return 64 * 1024 * 1024  # v7x per-TensorCore floor; conservative on v5e/v6e


def _feature_resizer_kernel(x_ref, w_ref, p_ref, o_ref, *, eps, do_ln):
    # x_ref : (tm, C1)  streamed input row tile (native dtype)
    # w_ref : (C1, C2)  resident transposed weight (native dtype)
    # p_ref : (8, C2)   fused params (f32): row0=bias, row1=gamma, row2=beta
    # o_ref : (tm, C2)  output tile
    #
    # Linear: native-dtype operands straight to the MXU, f32 accumulation.
    y = jnp.dot(x_ref[...], w_ref[...], preferred_element_type=jnp.float32)
    params = p_ref[...]
    y = y + params[0:1, :]  # bias

    if do_ln:
        # Feature dim is exact (no padded lanes), so unmasked full-row statistics.
        mean = jnp.mean(y, axis=-1, keepdims=True)
        centered = y - mean
        var = jnp.mean(centered * centered, axis=-1, keepdims=True)
        y = centered * lax.rsqrt(var + eps)
        y = y * params[1:2, :] + params[2:3, :]  # gamma, beta

    # Dropout in eval mode == identity.
    o_ref[...] = y.astype(o_ref.dtype)


def prepare_feature_resizer_params(w, b, gamma=None, beta=None):
    """One-time weight prep: transpose the PyTorch-layout weight (C2, C1) -> (C1, C2)
    and fuse bias/gamma/beta into a single resident (8, C2) f32 slab (1 DMA, not 3).
    Hoist this out of the per-call path; with static weights it constant-folds under jit.
    """
    c2, _ = w.shape
    w_t = jnp.transpose(w)
    params = jnp.zeros((8, c2), dtype=jnp.float32)
    params = params.at[0].set(b.astype(jnp.float32))
    if gamma is not None:
        params = params.at[1].set(gamma.astype(jnp.float32))
    if beta is not None:
        params = params.at[2].set(beta.astype(jnp.float32))
    return w_t, params


def feature_resizer_apply(x, w_t, params, *, eps=1e-12, do_ln=True, tile_rows=512):
    """x: (..., C1); w_t: (C1, C2) pre-transposed weight; params: (8, C2) fused slab."""
    c1, c2 = w_t.shape
    assert x.shape[-1] == c1, "feature dim mismatch"
    lead = x.shape[:-1]
    n = 1
    for d in lead:
        n *= d
    if n == 0:
        return jnp.zeros((*lead, c2), dtype=x.dtype)

    x2 = x.reshape(n, c1)
    x_item = jnp.dtype(x.dtype).itemsize
    w_item = jnp.dtype(w_t.dtype).itemsize

    # Per-chip VMEM budget (v7x 64 MiB vs v5e/v6e 128 MiB) drives the row-tile size.
    budget = int(0.85 * _vmem_capacity_bytes())
    resident = c1 * c2 * w_item + 8 * c2 * 4              # single-buffered residents
    per_row = 2 * (c1 * x_item + c2 * x_item)             # double-buffered x / out tiles
    avail = max(budget - resident - (2 << 20), per_row * 8)
    tm = min(tile_rows, max(8, (avail // per_row) // 8 * 8))
    # Megacore: keep >= 2 row tiles so the "parallel" axis shards over v7x's two TCs.
    half_rows = _round_up(max((n + 1) // 2, 1), 8)
    tm = max(8, min(tm, half_rows))
    grid = pl.cdiv(n, tm)

    # Conservative limit (covers the double-buffered-W fallback too), capped per-chip.
    vmem_need = (2 * c1 * c2 * w_item + 2 * 8 * c2 * 4
                 + 2 * tm * c1 * x_item + 2 * tm * c2 * x_item)
    vmem_limit = int(min(budget, max(2 * vmem_need, 32 * 1024 * 1024)))

    cost = pl.CostEstimate(
        flops=2 * n * c1 * c2,
        transcendentals=n if do_ln else 0,
        bytes_accessed=(n * c1 + n * c2) * x_item + c1 * c2 * w_item + 8 * c2 * 4,
    )
    kernel = functools.partial(_feature_resizer_kernel, eps=eps, do_ln=do_ln)

    def run(single_buffer_resident):
        resident_mode = {}
        if single_buffer_resident:
            # Constant index_map -> one VMEM buffer is enough; halves resident footprint.
            resident_mode = dict(pipeline_mode=pl.Buffered(1))
        grid_spec = pltpu.PrefetchScalarGridSpec(
            num_scalar_prefetch=0,
            grid=(grid,),
            in_specs=[
                pl.BlockSpec((tm, c1), lambda i: (i, 0)),                    # streamed rows
                pl.BlockSpec((c1, c2), lambda i: (0, 0), **resident_mode),   # resident W^T
                pl.BlockSpec((8, c2), lambda i: (0, 0), **resident_mode),    # bias/gamma/beta
            ],
            out_specs=pl.BlockSpec((tm, c2), lambda i: (i, 0)),
        )
        return pl.pallas_call(
            kernel,
            out_shape=jax.ShapeDtypeStruct((n, c2), x.dtype),
            grid_spec=grid_spec,
            compiler_params=pltpu.CompilerParams(
                dimension_semantics=("parallel",),
                vmem_limit_bytes=vmem_limit,
            ),
            cost_estimate=cost,
        )(x2, w_t, params)

    try:
        out = run(True)
    except Exception:
        # pl.Buffered(1) rejected on this jax build -> fall back to default buffering.
        out = run(False)
    return out.reshape(*lead, c2)


def feature_resizer_forward(x, w, b, gamma, beta, *, eps=1e-12, do_ln=True,
                            tile_rows=512):
    """Convenience wrapper: w is PyTorch-layout (C2, C1)."""
    w_t, params = prepare_feature_resizer_params(w, b, gamma, beta)
    return feature_resizer_apply(x, w_t, params, eps=eps, do_ln=do_ln,
                                 tile_rows=tile_rows)


def _reference(x, w, b, gamma, beta, *, eps=1e-12, do_ln=True):
    y = jnp.einsum("...i,oi->...o", x, w) + b
    if do_ln:
        mean = jnp.mean(y, axis=-1, keepdims=True)
        var = jnp.mean((y - mean) ** 2, axis=-1, keepdims=True)
        y = (y - mean) * lax.rsqrt(var + eps)
        y = y * gamma + beta
    return y


def _make_params(key, c1, c2):
    k_w, k_b, k_g, k_beta = jax.random.split(key, 4)
    bound = 1.0 / (c1 ** 0.5)
    w = jax.random.uniform(k_w, (c2, c1), minval=-bound, maxval=bound,
                           dtype=jnp.float32)
    b = jax.random.uniform(k_b, (c2,), minval=-bound, maxval=bound,
                           dtype=jnp.float32)
    gamma = jnp.ones((c2,), dtype=jnp.float32) \
        + 0.01 * jax.random.normal(k_g, (c2,), dtype=jnp.float32)
    beta = 0.01 * jax.random.normal(k_beta, (c2,), dtype=jnp.float32)
    return w, b, gamma, beta


if __name__ == "__main__":
    key = jax.random.PRNGKey(0)
    k1, k2, kp1, kp2 = jax.random.split(key, 4)

    # Case 1: the module's canonical small shapes (batch=2, seq=8, C1=16 -> C2=32).
    batch, seq, c1, c2 = 2, 8, 16, 32
    x = jax.random.normal(k1, (batch, seq, c1), dtype=jnp.float32)
    w, b, gamma, beta = _make_params(kp1, c1, c2)

    # Prepare weights once (hoisted out of the hot path), then apply.
    w_t, params = prepare_feature_resizer_params(w, b, gamma, beta)
    out = feature_resizer_apply(x, w_t, params, eps=1e-12, do_ln=True)
    out = jax.block_until_ready(out)
    ref = _reference(x, w, b, gamma, beta, eps=1e-12, do_ln=True)
    assert out.shape == (batch, seq, c2)
    assert jnp.allclose(out, ref, atol=2e-5, rtol=2e-5), "mismatch vs JAX reference (case 1)"

    # Case 2: odd shapes exercising a partial last row tile (grid=2, last tile 55 rows)
    # and non-128-multiple feature dims without any wrapper-side pad/slice.
    batch2, seq2, c1b, c2b = 3, 37, 48, 96
    x2 = jax.random.normal(k2, (batch2, seq2, c1b), dtype=jnp.float32)
    w2, b2, gamma2, beta2 = _make_params(kp2, c1b, c2b)

    out2 = feature_resizer_forward(x2, w2, b2, gamma2, beta2, eps=1e-12, do_ln=True)
    out2 = jax.block_until_ready(out2)
    ref2 = _reference(x2, w2, b2, gamma2, beta2, eps=1e-12, do_ln=True)
    assert out2.shape == (batch2, seq2, c2b)
    assert jnp.allclose(out2, ref2, atol=2e-5, rtol=2e-5), "mismatch vs JAX reference (case 2)"

    print("KERNEL_OK")
</pallas_src>

<mosaic_0001>
module attributes {stable_mosaic.version = 11 : i64} {
  func.func @_feature_resizer_kernel(%arg0: i32, %arg1: memref<8x16xf32, #tpu.memory_space<vmem>>, %arg2: memref<16x32xf32, #tpu.memory_space<vmem>>, %arg3: memref<8x32xf32, #tpu.memory_space<vmem>>, %arg4: memref<8x32xf32, #tpu.memory_space<vmem>>) attributes {dimension_semantics = [#tpu.dimension_semantics<parallel>], iteration_bounds = array<i64: 2>, scalar_prefetch = 0 : i64, scratch_operands = 0 : i64, tpu.core_type = #tpu.core_type<tc>, window_params = [{transform_indices = @transform_0, window_bounds = array<i64: 8, 16>}, {pipeline_mode = #tpu.pipeline_mode<synchronous>, transform_indices = @transform_1, window_bounds = array<i64: 16, 32>}, {pipeline_mode = #tpu.pipeline_mode<synchronous>, transform_indices = @transform_2, window_bounds = array<i64: 8, 32>}, {transform_indices = @transform_3, window_bounds = array<i64: 8, 32>}]} {
    %c0 = arith.constant 0 : index
    %c0_0 = arith.constant 0 : index
    %0 = vector.load %arg1[%c0, %c0_0] : memref<8x16xf32, #tpu.memory_space<vmem>>, vector<8x16xf32>
    %c0_1 = arith.constant 0 : index
    %c0_2 = arith.constant 0 : index
    %1 = vector.load %arg2[%c0_1, %c0_2] : memref<16x32xf32, #tpu.memory_space<vmem>>, vector<16x32xf32>
    %cst = arith.constant dense<0.000000e+00> : vector<8x32xf32>
    %2 = tpu.matmul %0, %1, %cst {dimension_numbers = #tpu.dot_dimension_numbers<[1], [0], [0], [1], [0, 0, 1, 1], [], []>} : vector<8x16xf32>, vector<16x32xf32>, vector<8x32xf32> -> vector<8x32xf32>
    %c0_3 = arith.constant 0 : index
    %c0_4 = arith.constant 0 : index
    %3 = vector.load %arg3[%c0_3, %c0_4] : memref<8x32xf32, #tpu.memory_space<vmem>>, vector<8x32xf32>
    %4 = vector.extract_strided_slice %3 {offsets = [0, 0], sizes = [1, 32], strides = [1, 1]} : vector<8x32xf32> to vector<1x32xf32>
    %5 = vector.broadcast %4 : vector<1x32xf32> to vector<8x32xf32>
    %6 = arith.addf %2, %5 : vector<8x32xf32>
    %cst_5 = arith.constant dense<0.000000e+00> : vector<8xf32>
    %7 = vector.multi_reduction <add>, %6, %cst_5 [1] : vector<8x32xf32> to vector<8xf32>
    %8 = vector.shape_cast %7 : vector<8xf32> to vector<8x1xf32>
    %cst_6 = arith.constant 3.200000e+01 : f32
    %9 = vector.broadcast %cst_6 : f32 to vector<8x1xf32>
    %10 = arith.divf %8, %9 : vector<8x1xf32>
    %11 = vector.broadcast %10 : vector<8x1xf32> to vector<8x32xf32>
    %12 = arith.subf %6, %11 : vector<8x32xf32>
    %13 = arith.mulf %12, %12 : vector<8x32xf32>
    %cst_7 = arith.constant dense<0.000000e+00> : vector<8xf32>
    %14 = vector.multi_reduction <add>, %13, %cst_7 [1] : vector<8x32xf32> to vector<8xf32>
    %15 = vector.shape_cast %14 : vector<8xf32> to vector<8x1xf32>
    %cst_8 = arith.constant 3.200000e+01 : f32
    %16 = vector.broadcast %cst_8 : f32 to vector<8x1xf32>
    %17 = arith.divf %15, %16 : vector<8x1xf32>
    %cst_9 = arith.constant 9.99999996E-13 : f32
    %18 = vector.broadcast %cst_9 : f32 to vector<8x1xf32>
    %19 = arith.addf %17, %18 : vector<8x1xf32>
    %20 = math.rsqrt %19 : vector<8x1xf32>
    %21 = vector.broadcast %20 : vector<8x1xf32> to vector<8x32xf32>
    %22 = arith.mulf %12, %21 : vector<8x32xf32>
    %23 = vector.extract_strided_slice %3 {offsets = [1, 0], sizes = [1, 32], strides = [1, 1]} : vector<8x32xf32> to vector<1x32xf32>
    %24 = vector.broadcast %23 : vector<1x32xf32> to vector<8x32xf32>
    %25 = arith.mulf %22, %24 : vector<8x32xf32>
    %26 = vector.extract_strided_slice %3 {offsets = [2, 0], sizes = [1, 32], strides = [1, 1]} : vector<8x32xf32> to vector<1x32xf32>
    %27 = vector.broadcast %26 : vector<1x32xf32> to vector<8x32xf32>
    %28 = arith.addf %25, %27 : vector<8x32xf32>
    %c0_10 = arith.constant 0 : index
    %c0_11 = arith.constant 0 : index
    %29 = vector.load %arg4[%c0_10, %c0_11] : memref<8x32xf32, #tpu.memory_space<vmem>>, vector<8x32xf32>
    tpu.vector_store %arg4[%c0_10, %c0_11], %28 {strides = array<i32>} : memref<8x32xf32, #tpu.memory_space<vmem>>, vector<8x32xf32>,
    return
  }
  func.func @transform_0(%arg0: i32) -> (i32, i32) {
    %c0_i32 = arith.constant 0 : i32
    %c0_i32_0 = arith.constant 0 : i32
    return %arg0, %c0_i32 : i32, i32
  }
  func.func @transform_1(%arg0: i32) -> (i32, i32) {
    %c0_i32 = arith.constant 0 : i32
    %c0_i32_0 = arith.constant 0 : i32
    %c0_i32_1 = arith.constant 0 : i32
    return %c0_i32, %c0_i32_0 : i32, i32
  }
  func.func @transform_2(%arg0: i32) -> (i32, i32) {
    %c0_i32 = arith.constant 0 : i32
    %c0_i32_0 = arith.constant 0 : i32
    %c0_i32_1 = arith.constant 0 : i32
    return %c0_i32, %c0_i32_0 : i32, i32
  }
  func.func @transform_3(%arg0: i32) -> (i32, i32) {
    %c0_i32 = arith.constant 0 : i32
    %c0_i32_0 = arith.constant 0 : i32
    return %arg0, %c0_i32 : i32, i32
  }
}

module attributes {stable_mosaic.version = 11 : i64} {
  func.func @_feature_resizer_kernel(%arg0: i32, %arg1: memref<8x16xf32, #tpu.memory_space<vmem>>, %arg2: memref<16x32xf32, #tpu.memory_space<vmem>>, %arg3: memref<8x32xf32, #tpu.memory_space<vmem>>, %arg4: memref<8x32xf32, #tpu.memory_space<vmem>>) attributes {dimension_semantics = [#tpu.dimension_semantics<parallel>], iteration_bounds = array<i64: 2>, scalar_prefetch = 0 : i64, scratch_operands = 0 : i64, tpu.core_type = #tpu.core_type<tc>, window_params = [{transform_indices = @transform_0, window_bounds = array<i64: 8, 16>}, {pipeline_mode = #tpu.pipeline_mode<synchronous>, transform_indices = @transform_1, window_bounds = array<i64: 16, 32>}, {pipeline_mode = #tpu.pipeline_mode<synchronous>, transform_indices = @transform_2, window_bounds = array<i64: 8, 32>}, {transform_indices = @transform_3, window_bounds = array<i64: 8, 32>}]} {
    %c0 = arith.constant 0 : index
    %c0_0 = arith.constant 0 : index
    %0 = vector.load %arg1[%c0, %c0_0] : memref<8x16xf32, #tpu.memory_space<vmem>>, vector<8x16xf32>
    %c0_1 = arith.constant 0 : index
    %c0_2 = arith.constant 0 : index
    %1 = vector.load %arg2[%c0_1, %c0_2] : memref<16x32xf32, #tpu.memory_space<vmem>>, vector<16x32xf32>
    %cst = arith.constant dense<0.000000e+00> : vector<8x32xf32>
    %2 = tpu.matmul %0, %1, %cst {dimension_numbers = #tpu.dot_dimension_numbers<[1], [0], [0], [1], [0, 0, 1, 1], [], []>} : vector<8x16xf32>, vector<16x32xf32>, vector<8x32xf32> -> vector<8x32xf32>
    %c0_3 = arith.constant 0 : index
    %c0_4 = arith.constant 0 : index
    %3 = vector.load %arg3[%c0_3, %c0_4] : memref<8x32xf32, #tpu.memory_space<vmem>>, vector<8x32xf32>
    %4 = vector.extract_strided_slice %3 {offsets = [0, 0], sizes = [1, 32], strides = [1, 1]} : vector<8x32xf32> to vector<1x32xf32>
    %5 = vector.broadcast %4 : vector<1x32xf32> to vector<8x32xf32>
    %6 = arith.addf %2, %5 : vector<8x32xf32>
    %cst_5 = arith.constant dense<0.000000e+00> : vector<8xf32>
    %7 = vector.multi_reduction <add>, %6, %cst_5 [1] : vector<8x32xf32> to vector<8xf32>
    %8 = vector.shape_cast %7 : vector<8xf32> to vector<8x1xf32>
    %cst_6 = arith.constant 3.200000e+01 : f32
    %9 = vector.broadcast %cst_6 : f32 to vector<8x1xf32>
    %10 = arith.divf %8, %9 : vector<8x1xf32>
    %11 = vector.broadcast %10 : vector<8x1xf32> to vector<8x32xf32>
    %12 = arith.subf %6, %11 : vector<8x32xf32>
    %13 = arith.mulf %12, %12 : vector<8x32xf32>
    %cst_7 = arith.constant dense<0.000000e+00> : vector<8xf32>
    %14 = vector.multi_reduction <add>, %13, %cst_7 [1] : vector<8x32xf32> to vector<8xf32>
    %15 = vector.shape_cast %14 : vector<8xf32> to vector<8x1xf32>
    %cst_8 = arith.constant 3.200000e+01 : f32
    %16 = vector.broadcast %cst_8 : f32 to vector<8x1xf32>
    %17 = arith.divf %15, %16 : vector<8x1xf32>
    %cst_9 = arith.constant 9.99999996E-13 : f32
    %18 = vector.broadcast %cst_9 : f32 to vector<8x1xf32>
    %19 = arith.addf %17, %18 : vector<8x1xf32>
    %20 = math.rsqrt %19 : vector<8x1xf32>
    %21 = vector.broadcast %20 : vector<8x1xf32> to vector<8x32xf32>
    %22 = arith.mulf %12, %21 : vector<8x32xf32>
    %23 = vector.extract_strided_slice %3 {offsets = [1, 0], sizes = [1, 32], strides = [1, 1]} : vector<8x32xf32> to vector<1x32xf32>
    %24 = vector.broadcast %23 : vector<1x32xf32> to vector<8x32xf32>
    %25 = arith.mulf %22, %24 : vector<8x32xf32>
    %26 = vector.extract_strided_slice %3 {offsets = [2, 0], sizes = [1, 32], strides = [1, 1]} : vector<8x32xf32> to vector<1x32xf32>
    %27 = vector.broadcast %26 : vector<1x32xf32> to vector<8x32xf32>
    %28 = arith.addf %25, %27 : vector<8x32xf32>
    %c0_10 = arith.constant 0 : index
    %c0_11 = arith.constant 0 : index
    %29 = vector.load %arg4[%c0_10, %c0_11] : memref<8x32xf32, #tpu.memory_space<vmem>>, vector<8x32xf32>
    tpu.vector_store %arg4[%c0_10, %c0_11], %28 {strides = array<i32>} : memref<8x32xf32, #tpu.memory_space<vmem>>, vector<8x32xf32>,
    return
  }
  func.func @transform_0(%arg0: i32) -> (i32, i32) {
    %c0_i32 = arith.constant 0 : i32
    %c0_i32_0 = arith.constant 0 : i32
    return %arg0, %c0_i32 : i32, i32
  }
  func.func @transform_1(%arg0: i32) -> (i32, i32) {
    %c0_i32 = arith.constant 0 : i32
    %c0_i32_0 = arith.constant 0 : i32
    %c0_i32_1 = arith.constant 0 : i32
    return %c0_i32, %c0_i32_0 : i32, i32
  }
  func.func @transform_2(%arg0: i32) -> (i32, i32) {
    %c0_i32 = arith.constant 0 : i32
    %c0_i32_0 = arith.constant 0 : i32
    %c0_i32_1 = arith.constant 0 : i32
    return %c0_i32, %c0_i32_0 : i32, i32
  }
  func.func @transform_3(%arg0: i32) -> (i32, i32) {
    %c0_i32 = arith.constant 0 : i32
    %c0_i32_0 = arith.constant 0 : i32
    return %arg0, %c0_i32 : i32, i32
  }
}

</mosaic_0001>

<llo_original>
// kernel: tpu_custom_call.1
$region0: #{tpu_custom_call.1}
  #allocation0 [shape = 'u32[]', space=smem, size = 0x4, offset = 0x4, fixed_abs, tag = 'smem constant byte address 0x4 - core index']
  #allocation1 [shape = 'u32[144,128]{1,0:T(1,128)}', space=vmem, size = 0x12000, scoped, tag = 'internal scratch']
  %s0 = inlined_call_operand.hbm [shape: f32[16,16], index: 0, kind: input, shape index: {}]
  %s1 = inlined_call_operand.hbm [shape: f32[16,32], index: 1, kind: input, shape index: {}]
  %s2 = inlined_call_operand.hbm [shape: f32[8,32], index: 2, kind: input, shape index: {}]
  %s3 = inlined_call_operand.hbm [shape: f32[16,32], index: 3, kind: output, shape index: {}]
  %s4 = sld [smem:[#allocation0]]
  $region57: #{tpu_custom_call.1} parent=0
    _
  %s6 = ssub.s32 1, %s4
  %s7 = scalar_select 0, %s6, %s4
  $region1: #{tpu_custom_call.1} parent=0
    #allocation2 [shape = 'u8[8192]{0}', space=vmem, size = 0x2000, scoped, tag = 'input window, operand 0']
    #allocation3 [shape = 's32[2]{0}', space=sflag, size = 0x8, scoped, tag = 'scoped memory for tpu_custom_call.1']
    #allocation4 [shape = 's32[2]{0}', space=sflag, size = 0x8, scoped, tag = 'scoped memory for tpu_custom_call.1']
    #allocation5 [shape = 'u8[8192]{0}', space=vmem, size = 0x2000, scoped, tag = 'input window, operand 1, single buffered']
    #allocation6 [shape = 's32[1]{0}', space=sflag, size = 0x4, scoped, tag = 'scoped memory for tpu_custom_call.1']
    #allocation7 [shape = 'u8[4096]{0}', space=vmem, size = 0x1000, scoped, tag = 'input window, operand 2, single buffered']
    #allocation8 [shape = 'u8[8192]{0}', space=vmem, size = 0x2000, scoped, tag = 'output window, operand 0']
    %8 = vsyncpa [#allocation3], 0
    %s9 = scalar_lea.sflag [#allocation3], 1
    %10 = vsyncpa %s9, 0
    %11 = vsyncpa [#allocation6], 0
    %12 = vsyncpa [#allocation4], 0
    %s13 = scalar_lea.sflag [#allocation4], 1
    %14 = vsyncpa %s13, 0
    loop: start=0, step=1, limit=4
    $region2: #{tpu_custom_call.1} parent=1 // loop_pre_header
      _
    $region3: #{tpu_custom_call.1} parent=1 // loop_header
      %s16 = sphi 0, %s20
      %p17 = scmp.ge.s32.totalorder %s16, 4
      %s26 = sphi 0, %s28
      %s29 = sphi 0, %s26
      %s30 = sphi 0, %s29
      %s46 = sphi 0, %s30
      %s50 = sphi 0, %s50
      %s52 = sphi 0, %s50
      %s53 = sphi 0, %s52
      %s67 = sphi 0, %s53
      %s71 = sphi 0, %s71
      %s73 = sphi 0, %s71
      %s74 = sphi 0, %s73
      %s88 = sphi 0, %s74
      %s94 = sphi 0, %s96
      %s97 = sphi 0, %s94
      %s98 = sphi 0, %s97
      %s114 = sphi 0, %s98
    $region4: #{tpu_custom_call.1} parent=1 // loop_header_branch
      %19 = sbr.rel (%p17) target = $region8
    $region5: #{tpu_custom_call.1} parent=1 // loop_body
      %s21 = ssub.s32 %s16, 1
      %s22 = ssub.s32 %s16, 2
      %s23 = sadd.s32 %s16, 1
      %s24 = ssub.s32 %s16, %s23
      %p25 = scmp.eq.s32.totalorder %s24, 0
      %s27 = sadd.s32 %s26, 1
      %s28 = scalar_select %p25, %s26, %s27
      %p31 = pneg %p25
      %p32 = scmp.eq.s32.totalorder %s16, 1
      %p33 = por %p31, %p32
      %p34 = scmp.ne.s32.totalorder %s26, %s29
      %p35 = scmp.eq.s32.totalorder %s16, 0
      %p36 = por %p34, %p35
      %p37 = scmp.ne.s32.totalorder %s26, %s29
      %p38 = scmp.eq.s32.totalorder %s21, 1
      %p39 = por %p37, %p38
      %p40 = scmp.ne.s32.totalorder %s29, %s30
      %p41 = scmp.eq.s32.totalorder %s21, 0
      %p42 = por %p40, %p41
      %p43 = scmp.ne.s32.totalorder %s29, %s30
      %p44 = scmp.eq.s32.totalorder %s22, 1
      %p45 = por %p43, %p44
      %p47 = scmp.ne.s32.totalorder %s30, %s46
      %p48 = scmp.eq.s32.totalorder %s22, 0
      %p49 = por %p47, %p48
      %s51 = sadd.s32 %s50, 1
      %p54 = scmp.eq.s32.totalorder %s16, 1
      %p55 = scmp.ne.s32.totalorder %s50, %s52
      %p56 = scmp.eq.s32.totalorder %s16, 0
      %p57 = por %p55, %p56
      %p58 = scmp.ne.s32.totalorder %s50, %s52
      %p59 = scmp.eq.s32.totalorder %s21, 1
      %p60 = por %p58, %p59
      %p61 = scmp.ne.s32.totalorder %s52, %s53
      %p62 = scmp.eq.s32.totalorder %s21, 0
      %p63 = por %p61, %p62
      %p64 = scmp.ne.s32.totalorder %s52, %s53
      %p65 = scmp.eq.s32.totalorder %s22, 1
      %p66 = por %p64, %p65
      %p68 = scmp.ne.s32.totalorder %s53, %s67
      %p69 = scmp.eq.s32.totalorder %s22, 0
      %p70 = por %p68, %p69
      %s72 = sadd.s32 %s71, 1
      %p75 = scmp.eq.s32.totalorder %s16, 1
      %p76 = scmp.ne.s32.totalorder %s71, %s73
      %p77 = scmp.eq.s32.totalorder %s16, 0
      %p78 = por %p76, %p77
      %p79 = scmp.ne.s32.totalorder %s71, %s73
      %p80 = scmp.eq.s32.totalorder %s21, 1
      %p81 = por %p79, %p80
      %p82 = scmp.ne.s32.totalorder %s73, %s74
      %p83 = scmp.eq.s32.totalorder %s21, 0
      %p84 = por %p82, %p83
      %p85 = scmp.ne.s32.totalorder %s73, %s74
      %p86 = scmp.eq.s32.totalorder %s22, 1
      %p87 = por %p85, %p86
      %p89 = scmp.ne.s32.totalorder %s74, %s88
      %p90 = scmp.eq.s32.totalorder %s22, 0
      %p91 = por %p89, %p90
      %s92 = ssub.s32 %s16, %s23
      %p93 = scmp.eq.s32.totalorder %s92, 0
      %s95 = sadd.s32 %s94, 1
      %s96 = scalar_select %p93, %s94, %s95
      %p99 = pneg %p93
      %p100 = scmp.eq.s32.totalorder %s16, 1
      %p101 = por %p99, %p100
      %p102 = scmp.ne.s32.totalorder %s94, %s97
      %p103 = scmp.eq.s32.totalorder %s16, 0
      %p104 = por %p102, %p103
      %p105 = scmp.ne.s32.totalorder %s94, %s97
      %p106 = scmp.eq.s32.totalorder %s21, 1
      %p107 = por %p105, %p106
      %p108 = scmp.ne.s32.totalorder %s97, %s98
      %p109 = scmp.eq.s32.totalorder %s21, 0
      %p110 = por %p108, %p109
      %p111 = scmp.ne.s32.totalorder %s97, %s98
      %p112 = scmp.eq.s32.totalorder %s22, 1
      %p113 = por %p111, %p112
      %p115 = scmp.ne.s32.totalorder %s98, %s114
      %p116 = scmp.eq.s32.totalorder %s22, 0
      %p117 = por %p115, %p116
      %p118 = scmp.le.s32.totalorder 1, %s16
      %p119 = scmp.lt.s32.totalorder %s16, 3
      %p120 = pnand %p118, %p119
      %p121 = pneg %p120
      // Predicated region
      $region9: #{tpu_custom_call.1} parent=5 // pred_check
        _
      $region10: #{tpu_custom_call.1} parent=5 // pred_check_branch
        %123 = sbr.rel (%p120) target = $region12
      $region11: #{tpu_custom_call.1} parent=5 // pred_region
        %s124 = ssub.s32 %s16, 1
        // Predicated region
        $region13: #{tpu_custom_call.1} parent=11 // pred_check
          %p125 = pneg %p63
        $region14: #{tpu_custom_call.1} parent=11 // pred_check_branch
          %127 = sbr.rel (%p125) target = $region16
        $region15: #{tpu_custom_call.1} parent=11 // pred_region
          %s129 = ssub.s32 256, 256
          %130 = vsyncadd [#allocation6], %s129
          %s131 = sshll.u32 [#allocation5], 4
          %s132 = int_to_ptr.vmem [resolvable:$true] %s131
          %137 = dma.hbm_to_vmem [thread:$0]  %s1, 256, %s132, [#allocation6], 128, 128, 8
        $region16: #{tpu_custom_call.1} parent=11 // pred_fallthru
          _
        // Predicated region
        $region17: #{tpu_custom_call.1} parent=11 // pred_check
          %p138 = pneg %p84
        $region18: #{tpu_custom_call.1} parent=11 // pred_check_branch
          %140 = sbr.rel (%p138) target = $region20
        $region19: #{tpu_custom_call.1} parent=11 // pred_region
          %s142 = ssub.s32 128, 128
          %143 = vsyncadd [#allocation6], %s142
          %s145 = sshll.u32 [#allocation7], 4
          %s146 = int_to_ptr.vmem [resolvable:$true] %s145
          %148 = dma.hbm_to_vmem [thread:$0]  %s2, 128, %s146, [#allocation6]
        $region20: #{tpu_custom_call.1} parent=11 // pred_fallthru
          _
      $region12: #{tpu_custom_call.1} parent=5 // pred_fallthru
        _
      %p149 = scmp.lt.s32.totalorder %s16, 2
      // Predicated region
      $region21: #{tpu_custom_call.1} parent=5 // pred_check
        %p150 = pneg %p149
      $region22: #{tpu_custom_call.1} parent=5 // pred_check_branch
        %152 = sbr.rel (%p150) target = $region24
      $region23: #{tpu_custom_call.1} parent=5 // pred_region
        // Predicated region
        $region25: #{tpu_custom_call.1} parent=23 // pred_check
          %p153 = pneg %p36
        $region26: #{tpu_custom_call.1} parent=23 // pred_check_branch
          %155 = sbr.rel (%p153) target = $region28
        $region27: #{tpu_custom_call.1} parent=23 // pred_region
          %s156 = sand.u32 %s26, 1
          %s157 = scalar_lea.sflag [#allocation3], %s156
          %s158 = sand.u32 %s26, 1
          %s159 = smul.addr %s158, 8
          %s160 = scalar_lea.vmem [#allocation2], %s159
          %s162 = ssub.s32 128, 128
          %163 = vsyncadd %s157, %s162
          %s164 = smul.addr %s16, 128
          %s165 = scalar_lea.hbm %s0, %s164
          %s167 = sshll.u32 %s160, 4
          %s168 = int_to_ptr.vmem [resolvable:$true] %s167
          %170 = dma.hbm_to_vmem [thread:$0]  %s165, 128, %s168, %s157
        $region28: #{tpu_custom_call.1} parent=23 // pred_fallthru
          _
      $region24: #{tpu_custom_call.1} parent=5 // pred_fallthru
        _
      %p171 = scmp.le.s32.totalorder 1, %s16
      %p172 = scmp.lt.s32.totalorder %s16, 3
      %p173 = pnand %p171, %p172
      %p174 = pneg %p173
      // Predicated region
      $region29: #{tpu_custom_call.1} parent=5 // pred_check
        _
      $region30: #{tpu_custom_call.1} parent=5 // pred_check_branch
        %176 = sbr.rel (%p173) target = $region32
      $region31: #{tpu_custom_call.1} parent=5 // pred_region
        %s177 = ssub.s32 %s16, 1
        %s178 = sand.u32 %s29, 1
        %s179 = scalar_lea.sflag [#allocation3], %s178
        %s180 = sand.u32 %s29, 1
        %s181 = smul.addr %s180, 8
        %s182 = scalar_lea.vmem [#allocation2], %s181
        // Predicated region
        $region33: #{tpu_custom_call.1} parent=31 // pred_check
          %p183 = pneg %p42
        $region34: #{tpu_custom_call.1} parent=31 // pred_check_branch
          %185 = sbr.rel (%p183) target = $region36
        $region35: #{tpu_custom_call.1} parent=31 // pred_region
          %186 = dma.done %s179, 128
        $region36: #{tpu_custom_call.1} parent=31 // pred_fallthru
          _
        // Predicated region
        $region37: #{tpu_custom_call.1} parent=31 // pred_check
          %p187 = pneg %p63
        $region38: #{tpu_custom_call.1} parent=31 // pred_check_branch
          %189 = sbr.rel (%p187) target = $region40
        $region39: #{tpu_custom_call.1} parent=31 // pred_region
          %190 = dma.done [#allocation6], 256
        $region40: #{tpu_custom_call.1} parent=31 // pred_fallthru
          _
        // Predicated region
        $region41: #{tpu_custom_call.1} parent=31 // pred_check
          %p191 = pneg %p84
        $region42: #{tpu_custom_call.1} parent=31 // pred_check_branch
          %193 = sbr.rel (%p191) target = $region44
        $region43: #{tpu_custom_call.1} parent=31 // pred_region
          %194 = dma.done [#allocation6], 128
        $region44: #{tpu_custom_call.1} parent=31 // pred_fallthru
          _
        %s195 = sand.u32 %s29, 1
        %s196 = scalar_lea.sflag [#allocation3], %s195
        %s197 = sand.u32 %s29, 1
        %s198 = smul.addr %s197, 8
        %s199 = scalar_lea.vmem [#allocation2], %s198
        %p200 = pneg %p42
        %p201 = pneg %p39
        %p202 = pneg %p63
        %p203 = pneg %p60
        %p204 = pneg %p84
        %p205 = pneg %p81
        %p206 = pneg %p110
        %p207 = pneg %p107
        %s208 = sand.u32 %s97, 1
        %s209 = scalar_lea.sflag [#allocation4], %s208
        %s210 = sand.u32 %s97, 1
        %s211 = smul.addr %s210, 8
        %s212 = scalar_lea.vmem [#allocation8], %s211
        %v213 = vld [vmem:[%s182] sm:$0xff]
        %v214 = vld [vmem:[#allocation5] sm:$0xff]
        %v215 = vld [vmem:[#allocation5 + $0x8] sm:$0xff]
        %v216 = vld [vmem:[#allocation7] sm:$0xff]
        %v217 = vlaneseq
        %v218 = vshrl.u32 %v217, 7
        %v219 = vsub.s32 0, %v218
        %v220 = vrot.slane %v216, %v219
        %vm221 = vcmask 130048
        %v223 = vsel %vm221, %v213, 0
        %225 = vmatprep.subr.mxu0 0.0
        %226 = vmatpush1.msra.mxu0 %v214
        %227 = vmatprep.subr.mxu0 0.0
        %228 = vmatpush1.msra.mxu0 %v215
        %229 = vmatprep.subr.mxu0 0.0
        %230 = vmatpush1.msra.mxu0 0.0
        %231 = vmatprep.subr.mxu0 0.0
        %232 = vmatpush1.msra.mxu0 0.0
        %233 = vmatprep.subr.mxu0 0.0
        %234 = vmatpush1.msra.mxu0 0.0
        %235 = vmatprep.subr.mxu0 0.0
        %236 = vmatpush1.msra.mxu0 0.0
        %237 = vmatprep.subr.mxu0 0.0
        %238 = vmatpush1.msra.mxu0 0.0
        %239 = vmatprep.subr.mxu0 0.0
        %240 = vmatpush1.msra.mxu0 0.0
        %241 = vmatprep.subr.mxu0 0.0
        %242 = vmatpush1.msra.mxu0 0.0
        %243 = vmatprep.subr.mxu0 0.0
        %244 = vmatpush1.msra.mxu0 0.0
        %245 = vmatprep.subr.mxu0 0.0
        %246 = vmatpush1.msra.mxu0 0.0
        %247 = vmatprep.subr.mxu0 0.0
        %248 = vmatpush1.msra.mxu0 0.0
        %249 = vmatprep.subr.mxu0 0.0
        %250 = vmatpush1.msra.mxu0 0.0
        %251 = vmatprep.subr.mxu0 0.0
        %252 = vmatpush1.msra.mxu0 0.0
        %253 = vmatprep.subr.mxu0 0.0
        %254 = vmatpush1.msra.mxu0 0.0
        %255 = vmatprep.subr.mxu0 0.0
        %256 = vmatpush1.msra.mxu0 0.0
        %257 = vmatprep.subr.mxu0 0.0
        %258 = vmatpush1.msra.mxu0 0.0
        %259 = vmatprep.subr.mxu0 0.0
        %260 = vmatpush1.msra.mxu0 0.0
        %261 = vmatprep.subr.mxu0 0.0
        %262 = vmatpush1.msra.mxu0 0.0
        %263 = vmatprep.subr.mxu0 0.0
        %264 = vmatpush1.msra.mxu0 0.0
        %265 = vmatprep.subr.mxu0 0.0
        %266 = vmatpush1.msra.mxu0 0.0
        %267 = vmatprep.subr.mxu0 0.0
        %268 = vmatpush1.msra.mxu0 0.0
        %269 = vmatprep.subr.mxu0 0.0
        %270 = vmatpush1.msra.mxu0 0.0
        %271 = vmatprep.subr.mxu0 0.0
        %272 = vmatpush1.msra.mxu0 0.0
        %273 = vmatprep.subr.mxu0 0.0
        %274 = vmatpush1.msra.mxu0 0.0
        %275 = vmatprep.subr.mxu0 0.0
        %276 = vmatpush1.msra.mxu0 0.0
        %277 = vmatprep.subr.mxu0 0.0
        %278 = vmatpush1.msra.mxu0 0.0
        %279 = vmatprep.subr.mxu0 0.0
        %280 = vmatpush1.msra.mxu0 0.0
        %281 = vmatprep.subr.mxu0 0.0
        %282 = vmatpush1.msra.mxu0 0.0
        %283 = vmatprep.subr.mxu0 0.0
        %284 = vmatpush1.msra.mxu0 0.0
        %285 = vmatprep.subr.mxu0 0.0
        %286 = vmatpush1.msra.mxu0 0.0
        %287 = vmatprep.subr.mxu0 0.0
        %288 = vmatpush1.msra.mxu0 0.0
        %289 = vmatprep.mubr.f32.mxu0 0.0
        %290 = vmatmul.mubr.f32.gmra.mrb[0].mxu0 %v223
        %v291 = vpop.f32.mrb[0].mxu0
        %v292 = vadd.f32 %v220, %v291
        %v293 = vpop.f32.mrb[0].mxu0
        %294 = vdwg.mxu0
        %vm295 = vcmask 261120
        %v296 = vsel %vm295, %v292, 0.0
        %297 = vadd.xlane.f32.xlu0 %v296
        %v298 = vpop.xlane.xlu0 %297
        %v299 = vrcp.pop 32.0
        %v300 = vmul.f32 %v298, %v299
        %v301 = vsub.f32 %v292, %v300
        %v302 = vmul.f32 %v301, %v301
        %v303 = vsel %vm295, %v302, 0.0
        %304 = vadd.xlane.f32.xlu0 %v303
        %v305 = vpop.xlane.xlu0 %304
        %v306 = vmul.f32 %v305, %v299
        %v307 = vadd.f32 %v306, 1e-12
        %v308 = vrsqrt.pop %v307
        %v309 = vmul.f32 %v301, %v308
        %v310 = vlaneseq
        %v311 = vshrl.u32 %v310, 7
        %v312 = vsub.s32 1, %v311
        %v313 = vrot.slane %v216, %v312
        %v314 = vmul.f32 %v309, %v313
        %v315 = vlaneseq
        %v316 = vshrl.u32 %v315, 7
        %v317 = vsub.s32 2, %v316
        %v318 = vrot.slane %v216, %v317
        %v319 = vadd.f32 %v314, %v318
        %320 = vst.msk [vmem:[%s212] sm:$0xff] %vm295, %v319
        %s321 = sand.u32 %s97, 1
        %s322 = scalar_lea.sflag [#allocation4], %s321
        %s323 = sand.u32 %s97, 1
        %s324 = smul.addr %s323, 8
        %s325 = scalar_lea.vmem [#allocation8], %s324
        // Predicated region
        $region45: #{tpu_custom_call.1} parent=31 // pred_check
          %p326 = pneg %p107
        $region46: #{tpu_custom_call.1} parent=31 // pred_check_branch
          %328 = sbr.rel (%p326) target = $region48
        $region47: #{tpu_custom_call.1} parent=31 // pred_region
          %s330 = ssub.s32 128, 128
          %331 = vsyncadd %s322, %s330
          %s332 = smul.addr %s21, 128
          %s333 = scalar_lea.hbm %s3, %s332
          %s335 = sshll.u32 %s325, 4
          %s336 = int_to_ptr.vmem [resolvable:$true] %s335
          %338 = dma.vmem_to_hbm [thread:$0]  %s336, 128, %s333, %s322
        $region48: #{tpu_custom_call.1} parent=31 // pred_fallthru
          _
      $region32: #{tpu_custom_call.1} parent=5 // pred_fallthru
        _
      %p339 = scmp.le.s32.totalorder 2, %s16
      // Predicated region
      $region49: #{tpu_custom_call.1} parent=5 // pred_check
        %p340 = pneg %p339
      $region50: #{tpu_custom_call.1} parent=5 // pred_check_branch
        %342 = sbr.rel (%p340) target = $region52
      $region51: #{tpu_custom_call.1} parent=5 // pred_region
        %s343 = ssub.s32 %s16, 2
        // Predicated region
        $region53: #{tpu_custom_call.1} parent=51 // pred_check
          %p344 = pneg %p113
        $region54: #{tpu_custom_call.1} parent=51 // pred_check_branch
          %346 = sbr.rel (%p344) target = $region56
        $region55: #{tpu_custom_call.1} parent=51 // pred_region
          %s347 = sand.u32 %s98, 1
          %s348 = scalar_lea.sflag [#allocation4], %s347
          %s349 = sand.u32 %s98, 1
          %s350 = smul.addr %s349, 8
          %s351 = scalar_lea.vmem [#allocation8], %s350
          %352 = dma.done %s348, 128
        $region56: #{tpu_custom_call.1} parent=51 // pred_fallthru
          _
      $region52: #{tpu_custom_call.1} parent=5 // pred_fallthru
        _
    $region6: #{tpu_custom_call.1} parent=1 // loop_footer
      %s20 = sadd.s32 1, %s16
    $region7: #{tpu_custom_call.1} parent=1 // loop_footer_branch
      %15 = sbr.rel target = $region3
    $region8: #{tpu_custom_call.1} parent=1 // loop_exit
      _
    %353 = vsyncpa [#allocation3], 1
    %s354 = scalar_lea.sflag [#allocation3], 1
    %355 = vsyncpa %s354, 1
    %356 = vsyncpa [#allocation6], 1
    %357 = vsyncpa [#allocation4], 1
    %s358 = scalar_lea.sflag [#allocation4], 1
    %359 = vsyncpa %s358, 1

// kernel: tpu_custom_call.1
$region0: #{tpu_custom_call.1}
  #allocation0 [shape = 'u32[]', space=smem, size = 0x4, offset = 0x4, fixed_abs, tag = 'smem constant byte address 0x4 - core index']
  #allocation1 [shape = 'u32[144,128]{1,0:T(1,128)}', space=vmem, size = 0x12000, scoped, tag = 'internal scratch']
  %s0 = inlined_call_operand.hbm [shape: f32[16,16], index: 0, kind: input, shape index: {}]
  %s1 = inlined_call_operand.hbm [shape: f32[16,32], index: 1, kind: input, shape index: {}]
  %s2 = inlined_call_operand.hbm [shape: f32[8,32], index: 2, kind: input, shape index: {}]
  %s3 = inlined_call_operand.hbm [shape: f32[16,32], index: 3, kind: output, shape index: {}]
  %s4 = sld [smem:[#allocation0]]
  $region57: #{tpu_custom_call.1} parent=0
    _
  %s6 = ssub.s32 1, %s4
  %s7 = scalar_select 0, %s6, %s4
  $region1: #{tpu_custom_call.1} parent=0
    #allocation2 [shape = 'u8[8192]{0}', space=vmem, size = 0x2000, scoped, tag = 'input window, operand 0']
    #allocation3 [shape = 's32[2]{0}', space=sflag, size = 0x8, scoped, tag = 'scoped memory for tpu_custom_call.1']
    #allocation4 [shape = 's32[2]{0}', space=sflag, size = 0x8, scoped, tag = 'scoped memory for tpu_custom_call.1']
    #allocation5 [shape = 'u8[8192]{0}', space=vmem, size = 0x2000, scoped, tag = 'input window, operand 1, single buffered']
    #allocation6 [shape = 's32[1]{0}', space=sflag, size = 0x4, scoped, tag = 'scoped memory for tpu_custom_call.1']
    #allocation7 [shape = 'u8[4096]{0}', space=vmem, size = 0x1000, scoped, tag = 'input window, operand 2, single buffered']
    #allocation8 [shape = 'u8[8192]{0}', space=vmem, size = 0x2000, scoped, tag = 'output window, operand 0']
    %8 = vsyncpa [#allocation3], 0
    %s9 = scalar_lea.sflag [#allocation3], 1
    %10 = vsyncpa %s9, 0
    %11 = vsyncpa [#allocation6], 0
    %12 = vsyncpa [#allocation4], 0
    %s13 = scalar_lea.sflag [#allocation4], 1
    %14 = vsyncpa %s13, 0
    loop: start=0, step=1, limit=4
    $region2: #{tpu_custom_call.1} parent=1 // loop_pre_header
      _
    $region3: #{tpu_custom_call.1} parent=1 // loop_header
      %s16 = sphi 0, %s20
      %p17 = scmp.ge.s32.totalorder %s16, 4
      %s26 = sphi 0, %s28
      %s29 = sphi 0, %s26
      %s30 = sphi 0, %s29
      %s46 = sphi 0, %s30
      %s50 = sphi 0, %s50
      %s52 = sphi 0, %s50
      %s53 = sphi 0, %s52
      %s67 = sphi 0, %s53
      %s71 = sphi 0, %s71
      %s73 = sphi 0, %s71
      %s74 = sphi 0, %s73
      %s88 = sphi 0, %s74
      %s94 = sphi 0, %s96
      %s97 = sphi 0, %s94
      %s98 = sphi 0, %s97
      %s114 = sphi 0, %s98
    $region4: #{tpu_custom_call.1} parent=1 // loop_header_branch
      %19 = sbr.rel (%p17) target = $region8
    $region5: #{tpu_custom_call.1} parent=1 // loop_body
      %s21 = ssub.s32 %s16, 1
      %s22 = ssub.s32 %s16, 2
      %s23 = sadd.s32 %s16, 1
      %s24 = ssub.s32 %s16, %s23
      %p25 = scmp.eq.s32.totalorder %s24, 0
      %s27 = sadd.s32 %s26, 1
      %s28 = scalar_select %p25, %s26, %s27
      %p31 = pneg %p25
      %p32 = scmp.eq.s32.totalorder %s16, 1
      %p33 = por %p31, %p32
      %p34 = scmp.ne.s32.totalorder %s26, %s29
      %p35 = scmp.eq.s32.totalorder %s16, 0
      %p36 = por %p34, %p35
      %p37 = scmp.ne.s32.totalorder %s26, %s29
      %p38 = scmp.eq.s32.totalorder %s21, 1
      %p39 = por %p37, %p38
      %p40 = scmp.ne.s32.totalorder %s29, %s30
      %p41 = scmp.eq.s32.totalorder %s21, 0
      %p42 = por %p40, %p41
      %p43 = scmp.ne.s32.totalorder %s29, %s30
      %p44 = scmp.eq.s32.totalorder %s22, 1
      %p45 = por %p43, %p44
      %p47 = scmp.ne.s32.totalorder %s30, %s46
      %p48 = scmp.eq.s32.totalorder %s22, 0
      %p49 = por %p47, %p48
      %s51 = sadd.s32 %s50, 1
      %p54 = scmp.eq.s32.totalorder %s16, 1
      %p55 = scmp.ne.s32.totalorder %s50, %s52
      %p56 = scmp.eq.s32.totalorder %s16, 0
      %p57 = por %p55, %p56
      %p58 = scmp.ne.s32.totalorder %s50, %s52
      %p59 = scmp.eq.s32.totalorder %s21, 1
      %p60 = por %p58, %p59
      %p61 = scmp.ne.s32.totalorder %s52, %s53
      %p62 = scmp.eq.s32.totalorder %s21, 0
      %p63 = por %p61, %p62
      %p64 = scmp.ne.s32.totalorder %s52, %s53
      %p65 = scmp.eq.s32.totalorder %s22, 1
      %p66 = por %p64, %p65
      %p68 = scmp.ne.s32.totalorder %s53, %s67
      %p69 = scmp.eq.s32.totalorder %s22, 0
      %p70 = por %p68, %p69
      %s72 = sadd.s32 %s71, 1
      %p75 = scmp.eq.s32.totalorder %s16, 1
      %p76 = scmp.ne.s32.totalorder %s71, %s73
      %p77 = scmp.eq.s32.totalorder %s16, 0
      %p78 = por %p76, %p77
      %p79 = scmp.ne.s32.totalorder %s71, %s73
      %p80 = scmp.eq.s32.totalorder %s21, 1
      %p81 = por %p79, %p80
      %p82 = scmp.ne.s32.totalorder %s73, %s74
      %p83 = scmp.eq.s32.totalorder %s21, 0
      %p84 = por %p82, %p83
      %p85 = scmp.ne.s32.totalorder %s73, %s74
      %p86 = scmp.eq.s32.totalorder %s22, 1
      %p87 = por %p85, %p86
      %p89 = scmp.ne.s32.totalorder %s74, %s88
      %p90 = scmp.eq.s32.totalorder %s22, 0
      %p91 = por %p89, %p90
      %s92 = ssub.s32 %s16, %s23
      %p93 = scmp.eq.s32.totalorder %s92, 0
      %s95 = sadd.s32 %s94, 1
      %s96 = scalar_select %p93, %s94, %s95
      %p99 = pneg %p93
      %p100 = scmp.eq.s32.totalorder %s16, 1
      %p101 = por %p99, %p100
      %p102 = scmp.ne.s32.totalorder %s94, %s97
      %p103 = scmp.eq.s32.totalorder %s16, 0
      %p104 = por %p102, %p103
      %p105 = scmp.ne.s32.totalorder %s94, %s97
      %p106 = scmp.eq.s32.totalorder %s21, 1
      %p107 = por %p105, %p106
      %p108 = scmp.ne.s32.totalorder %s97, %s98
      %p109 = scmp.eq.s32.totalorder %s21, 0
      %p110 = por %p108, %p109
      %p111 = scmp.ne.s32.totalorder %s97, %s98
      %p112 = scmp.eq.s32.totalorder %s22, 1
      %p113 = por %p111, %p112
      %p115 = scmp.ne.s32.totalorder %s98, %s114
      %p116 = scmp.eq.s32.totalorder %s22, 0
      %p117 = por %p115, %p116
      %p118 = scmp.le.s32.totalorder 1, %s16
      %p119 = scmp.lt.s32.totalorder %s16, 3
      %p120 = pnand %p118, %p119
      %p121 = pneg %p120
      // Predicated region
      $region9: #{tpu_custom_call.1} parent=5 // pred_check
        _
      $region10: #{tpu_custom_call.1} parent=5 // pred_check_branch
        %123 = sbr.rel (%p120) target = $region12
      $region11: #{tpu_custom_call.1} parent=5 // pred_region
        %s124 = ssub.s32 %s16, 1
        // Predicated region
        $region13: #{tpu_custom_call.1} parent=11 // pred_check
          %p125 = pneg %p63
        $region14: #{tpu_custom_call.1} parent=11 // pred_check_branch
          %127 = sbr.rel (%p125) target = $region16
        $region15: #{tpu_custom_call.1} parent=11 // pred_region
          %s129 = ssub.s32 256, 256
          %130 = vsyncadd [#allocation6], %s129
          %s131 = sshll.u32 [#allocation5], 4
          %s132 = int_to_ptr.vmem [resolvable:$true] %s131
          %137 = dma.hbm_to_vmem [thread:$0]  %s1, 256, %s132, [#allocation6], 128, 128, 8
        $region16: #{tpu_custom_call.1} parent=11 // pred_fallthru
          _
        // Predicated region
        $region17: #{tpu_custom_call.1} parent=11 // pred_check
          %p138 = pneg %p84
        $region18: #{tpu_custom_call.1} parent=11 // pred_check_branch
          %140 = sbr.rel (%p138) target = $region20
        $region19: #{tpu_custom_call.1} parent=11 // pred_region
          %s142 = ssub.s32 128, 128
          %143 = vsyncadd [#allocation6], %s142
          %s145 = sshll.u32 [#allocation7], 4
          %s146 = int_to_ptr.vmem [resolvable:$true] %s145
          %148 = dma.hbm_to_vmem [thread:$0]  %s2, 128, %s146, [#allocation6]
        $region20: #{tpu_custom_call.1} parent=11 // pred_fallthru
          _
      $region12: #{tpu_custom_call.1} parent=5 // pred_fallthru
        _
      %p149 = scmp.lt.s32.totalorder %s16, 2
      // Predicated region
      $region21: #{tpu_custom_call.1} parent=5 // pred_check
        %p150 = pneg %p149
      $region22: #{tpu_custom_call.1} parent=5 // pred_check_branch
        %152 = sbr.rel (%p150) target = $region24
      $region23: #{tpu_custom_call.1} parent=5 // pred_region
        // Predicated region
        $region25: #{tpu_custom_call.1} parent=23 // pred_check
          %p153 = pneg %p36
        $region26: #{tpu_custom_call.1} parent=23 // pred_check_branch
          %155 = sbr.rel (%p153) target = $region28
        $region27: #{tpu_custom_call.1} parent=23 // pred_region
          %s156 = sand.u32 %s26, 1
          %s157 = scalar_lea.sflag [#allocation3], %s156
          %s158 = sand.u32 %s26, 1
          %s159 = smul.addr %s158, 8
          %s160 = scalar_lea.vmem [#allocation2], %s159
          %s162 = ssub.s32 128, 128
          %163 = vsyncadd %s157, %s162
          %s164 = smul.addr %s16, 128
          %s165 = scalar_lea.hbm %s0, %s164
          %s167 = sshll.u32 %s160, 4
          %s168 = int_to_ptr.vmem [resolvable:$true] %s167
          %170 = dma.hbm_to_vmem [thread:$0]  %s165, 128, %s168, %s157
        $region28: #{tpu_custom_call.1} parent=23 // pred_fallthru
          _
      $region24: #{tpu_custom_call.1} parent=5 // pred_fallthru
        _
      %p171 = scmp.le.s32.totalorder 1, %s16
      %p172 = scmp.lt.s32.totalorder %s16, 3
      %p173 = pnand %p171, %p172
      %p174 = pneg %p173
      // Predicated region
      $region29: #{tpu_custom_call.1} parent=5 // pred_check
        _
      $region30: #{tpu_custom_call.1} parent=5 // pred_check_branch
        %176 = sbr.rel (%p173) target = $region32
      $region31: #{tpu_custom_call.1} parent=5 // pred_region
        %s177 = ssub.s32 %s16, 1
        %s178 = sand.u32 %s29, 1
        %s179 = scalar_lea.sflag [#allocation3], %s178
        %s180 = sand.u32 %s29, 1
        %s181 = smul.addr %s180, 8
        %s182 = scalar_lea.vmem [#allocation2], %s181
        // Predicated region
        $region33: #{tpu_custom_call.1} parent=31 // pred_check
          %p183 = pneg %p42
        $region34: #{tpu_custom_call.1} parent=31 // pred_check_branch
          %185 = sbr.rel (%p183) target = $region36
        $region35: #{tpu_custom_call.1} parent=31 // pred_region
          %186 = dma.done %s179, 128
        $region36: #{tpu_custom_call.1} parent=31 // pred_fallthru
          _
        // Predicated region
        $region37: #{tpu_custom_call.1} parent=31 // pred_check
          %p187 = pneg %p63
        $region38: #{tpu_custom_call.1} parent=31 // pred_check_branch
          %189 = sbr.rel (%p187) target = $region40
        $region39: #{tpu_custom_call.1} parent=31 // pred_region
          %190 = dma.done [#allocation6], 256
        $region40: #{tpu_custom_call.1} parent=31 // pred_fallthru
          _
        // Predicated region
        $region41: #{tpu_custom_call.1} parent=31 // pred_check
          %p191 = pneg %p84
        $region42: #{tpu_custom_call.1} parent=31 // pred_check_branch
          %193 = sbr.rel (%p191) target = $region44
        $region43: #{tpu_custom_call.1} parent=31 // pred_region
          %194 = dma.done [#allocation6], 128
        $region44: #{tpu_custom_call.1} parent=31 // pred_fallthru
          _
        %s195 = sand.u32 %s29, 1
        %s196 = scalar_lea.sflag [#allocation3], %s195
        %s197 = sand.u32 %s29, 1
        %s198 = smul.addr %s197, 8
        %s199 = scalar_lea.vmem [#allocation2], %s198
        %p200 = pneg %p42
        %p201 = pneg %p39
        %p202 = pneg %p63
        %p203 = pneg %p60
        %p204 = pneg %p84
        %p205 = pneg %p81
        %p206 = pneg %p110
        %p207 = pneg %p107
        %s208 = sand.u32 %s97, 1
        %s209 = scalar_lea.sflag [#allocation4], %s208
        %s210 = sand.u32 %s97, 1
        %s211 = smul.addr %s210, 8
        %s212 = scalar_lea.vmem [#allocation8], %s211
        %v213 = vld [vmem:[%s182] sm:$0xff]
        %v214 = vld [vmem:[#allocation5] sm:$0xff]
        %v215 = vld [vmem:[#allocation5 + $0x8] sm:$0xff]
        %v216 = vld [vmem:[#allocation7] sm:$0xff]
        %v217 = vlaneseq
        %v218 = vshrl.u32 %v217, 7
        %v219 = vsub.s32 0, %v218
        %v220 = vrot.slane %v216, %v219
        %vm221 = vcmask 130048
        %v223 = vsel %vm221, %v213, 0
        %225 = vmatprep.subr.mxu0 0.0
        %226 = vmatpush1.msra.mxu0 %v214
        %227 = vmatprep.subr.mxu0 0.0
        %228 = vmatpush1.msra.mxu0 %v215
        %229 = vmatprep.subr.mxu0 0.0
        %230 = vmatpush1.msra.mxu0 0.0
        %231 = vmatprep.subr.mxu0 0.0
        %232 = vmatpush1.msra.mxu0 0.0
        %233 = vmatprep.subr.mxu0 0.0
        %234 = vmatpush1.msra.mxu0 0.0
        %235 = vmatprep.subr.mxu0 0.0
        %236 = vmatpush1.msra.mxu0 0.0
        %237 = vmatprep.subr.mxu0 0.0
        %238 = vmatpush1.msra.mxu0 0.0
        %239 = vmatprep.subr.mxu0 0.0
        %240 = vmatpush1.msra.mxu0 0.0
        %241 = vmatprep.subr.mxu0 0.0
        %242 = vmatpush1.msra.mxu0 0.0
        %243 = vmatprep.subr.mxu0 0.0
        %244 = vmatpush1.msra.mxu0 0.0
        %245 = vmatprep.subr.mxu0 0.0
        %246 = vmatpush1.msra.mxu0 0.0
        %247 = vmatprep.subr.mxu0 0.0
        %248 = vmatpush1.msra.mxu0 0.0
        %249 = vmatprep.subr.mxu0 0.0
        %250 = vmatpush1.msra.mxu0 0.0
        %251 = vmatprep.subr.mxu0 0.0
        %252 = vmatpush1.msra.mxu0 0.0
        %253 = vmatprep.subr.mxu0 0.0
        %254 = vmatpush1.msra.mxu0 0.0
        %255 = vmatprep.subr.mxu0 0.0
        %256 = vmatpush1.msra.mxu0 0.0
        %257 = vmatprep.subr.mxu0 0.0
        %258 = vmatpush1.msra.mxu0 0.0
        %259 = vmatprep.subr.mxu0 0.0
        %260 = vmatpush1.msra.mxu0 0.0
        %261 = vmatprep.subr.mxu0 0.0
        %262 = vmatpush1.msra.mxu0 0.0
        %263 = vmatprep.subr.mxu0 0.0
        %264 = vmatpush1.msra.mxu0 0.0
        %265 = vmatprep.subr.mxu0 0.0
        %266 = vmatpush1.msra.mxu0 0.0
        %267 = vmatprep.subr.mxu0 0.0
        %268 = vmatpush1.msra.mxu0 0.0
        %269 = vmatprep.subr.mxu0 0.0
        %270 = vmatpush1.msra.mxu0 0.0
        %271 = vmatprep.subr.mxu0 0.0
        %272 = vmatpush1.msra.mxu0 0.0
        %273 = vmatprep.subr.mxu0 0.0
        %274 = vmatpush1.msra.mxu0 0.0
        %275 = vmatprep.subr.mxu0 0.0
        %276 = vmatpush1.msra.mxu0 0.0
        %277 = vmatprep.subr.mxu0 0.0
        %278 = vmatpush1.msra.mxu0 0.0
        %279 = vmatprep.subr.mxu0 0.0
        %280 = vmatpush1.msra.mxu0 0.0
        %281 = vmatprep.subr.mxu0 0.0
        %282 = vmatpush1.msra.mxu0 0.0
        %283 = vmatprep.subr.mxu0 0.0
        %284 = vmatpush1.msra.mxu0 0.0
        %285 = vmatprep.subr.mxu0 0.0
        %286 = vmatpush1.msra.mxu0 0.0
        %287 = vmatprep.subr.mxu0 0.0
        %288 = vmatpush1.msra.mxu0 0.0
        %289 = vmatprep.mubr.f32.mxu0 0.0
        %290 = vmatmul.mubr.f32.gmra.mrb[0].mxu0 %v223
        %v291 = vpop.f32.mrb[0].mxu0
        %v292 = vadd.f32 %v220, %v291
        %v293 = vpop.f32.mrb[0].mxu0
        %294 = vdwg.mxu0
        %vm295 = vcmask 261120
        %v296 = vsel %vm295, %v292, 0.0
        %297 = vadd.xlane.f32.xlu0 %v296
        %v298 = vpop.xlane.xlu0 %297
        %v299 = vrcp.pop 32.0
        %v300 = vmul.f32 %v298, %v299
        %v301 = vsub.f32 %v292, %v300
        %v302 = vmul.f32 %v301, %v301
        %v303 = vsel %vm295, %v302, 0.0
        %304 = vadd.xlane.f32.xlu0 %v303
        %v305 = vpop.xlane.xlu0 %304
        %v306 = vmul.f32 %v305, %v299
        %v307 = vadd.f32 %v306, 1e-12
        %v308 = vrsqrt.pop %v307
        %v309 = vmul.f32 %v301, %v308
        %v310 = vlaneseq
        %v311 = vshrl.u32 %v310, 7
        %v312 = vsub.s32 1, %v311
        %v313 = vrot.slane %v216, %v312
        %v314 = vmul.f32 %v309, %v313
        %v315 = vlaneseq
        %v316 = vshrl.u32 %v315, 7
        %v317 = vsub.s32 2, %v316
        %v318 = vrot.slane %v216, %v317
        %v319 = vadd.f32 %v314, %v318
        %320 = vst.msk [vmem:[%s212] sm:$0xff] %vm295, %v319
        %s321 = sand.u32 %s97, 1
        %s322 = scalar_lea.sflag [#allocation4], %s321
        %s323 = sand.u32 %s97, 1
        %s324 = smul.addr %s323, 8
        %s325 = scalar_lea.vmem [#allocation8], %s324
        // Predicated region
        $region45: #{tpu_custom_call.1} parent=31 // pred_check
          %p326 = pneg %p107
        $region46: #{tpu_custom_call.1} parent=31 // pred_check_branch
          %328 = sbr.rel (%p326) target = $region48
        $region47: #{tpu_custom_call.1} parent=31 // pred_region
          %s330 = ssub.s32 128, 128
          %331 = vsyncadd %s322, %s330
          %s332 = smul.addr %s21, 128
          %s333 = scalar_lea.hbm %s3, %s332
          %s335 = sshll.u32 %s325, 4
          %s336 = int_to_ptr.vmem [resolvable:$true] %s335
          %338 = dma.vmem_to_hbm [thread:$0]  %s336, 128, %s333, %s322
        $region48: #{tpu_custom_call.1} parent=31 // pred_fallthru
          _
      $region32: #{tpu_custom_call.1} parent=5 // pred_fallthru
        _
      %p339 = scmp.le.s32.totalorder 2, %s16
      // Predicated region
      $region49: #{tpu_custom_call.1} parent=5 // pred_check
        %p340 = pneg %p339
      $region50: #{tpu_custom_call.1} parent=5 // pred_check_branch
        %342 = sbr.rel (%p340) target = $region52
      $region51: #{tpu_custom_call.1} parent=5 // pred_region
        %s343 = ssub.s32 %s16, 2
        // Predicated region
        $region53: #{tpu_custom_call.1} parent=51 // pred_check
          %p344 = pneg %p113
        $region54: #{tpu_custom_call.1} parent=51 // pred_check_branch
          %346 = sbr.rel (%p344) target = $region56
        $region55: #{tpu_custom_call.1} parent=51 // pred_region
          %s347 = sand.u32 %s98, 1
          %s348 = scalar_lea.sflag [#allocation4], %s347
          %s349 = sand.u32 %s98, 1
          %s350 = smul.addr %s349, 8
          %s351 = scalar_lea.vmem [#allocation8], %s350
          %352 = dma.done %s348, 128
        $region56: #{tpu_custom_call.1} parent=51 // pred_fallthru
          _
      $region52: #{tpu_custom_call.1} parent=5 // pred_fallthru
        _
    $region6: #{tpu_custom_call.1} parent=1 // loop_footer
      %s20 = sadd.s32 1, %s16
    $region7: #{tpu_custom_call.1} parent=1 // loop_footer_branch
      %15 = sbr.rel target = $region3
    $region8: #{tpu_custom_call.1} parent=1 // loop_exit
      _
    %353 = vsyncpa [#allocation3], 1
    %s354 = scalar_lea.sflag [#allocation3], 1
    %355 = vsyncpa %s354, 1
    %356 = vsyncpa [#allocation6], 1
    %357 = vsyncpa [#allocation4], 1
    %s358 = scalar_lea.sflag [#allocation4], 1
    %359 = vsyncpa %s358, 1

</llo_original>
